<compile_context>
chip_gen: v7x
topology: tpu7x:2x2x1
jax: 0.10.0
libtpu: 0.0.40
codegen_flags: <defaults>
</compile_context>

<pallas_src>
import functools

import jax
import jax.numpy as jnp
from jax.experimental import pallas as pl
from jax.experimental.pallas import tpu as pltpu


def _round_up(x, m):
    return ((x + m - 1) // m) * m


def _mlp_kernel(x_ref, w_ref, b_ref, out_ref):
    # bf16 MXU operands, f32 accumulation, f32 bias add on the VPU.
    acc = jnp.dot(x_ref[...], w_ref[...], preferred_element_type=jnp.float32)
    out_ref[...] = (acc + b_ref[...]).astype(out_ref.dtype)


def _resident_spec(shape):
    """BlockSpec for an operand that stays resident across the batch grid."""
    idx = lambda i: (0,) * len(shape)
    try:
        # Single-buffer: constant block index -> second pipeline buffer is waste.
        return pl.BlockSpec(shape, idx, pipeline_mode=pl.Buffered(1))
    except TypeError:  # older jax without pipeline_mode kwarg
        return pl.BlockSpec(shape, idx)


@functools.partial(jax.jit, static_argnames=("tm",))
def mlp_forward(x_flat, params, *, tm=None):
    """x_flat: [B, F_in] f32; params: list of (W [F_in, F_out], b [1, F_out])."""
    B, f_in = x_flat.shape
    n_out = params[-1][0].shape[1]

    # ---- hardware query (trace-time) ----------------------------------------
    try:
        vmem_cap = int(pltpu.get_tpu_info().vmem_capacity_bytes)
    except Exception:
        vmem_cap = 64 << 20  # conservative (v7x per-TC)
    vmem_usable = (vmem_cap * 7) // 8  # leave headroom for compiler scratch

    # ---- compose the activation-free layer chain in f32 ---------------------
    w_tot, b_tot = params[0][0], params[0][1].reshape(1, -1)
    for w, b in params[1:]:
        b_tot = b_tot @ w + b.reshape(1, -1)
        w_tot = w_tot @ w
    # w_tot: [F_in, F_out] f32, b_tot: [1, F_out] f32

    f_in_p = _round_up(f_in, 128)
    f_out_p = _round_up(n_out, 128)

    # ---- batch-tile selection ------------------------------------------------
    if tm is None:
        # big-VMEM chips (v5e/v6e, 128 MiB) get larger tiles than v7x (64 MiB)
        tm = 1024 if vmem_cap > (96 << 20) else 512
    b16 = _round_up(B, 16)                    # bf16 sublane packing
    n_steps = pl.cdiv(b16, tm)
    if b16 >= 32:
        n_steps = max(n_steps, 2)             # >=2 pipeline steps / 2 v7x TCs
    tm = _round_up(pl.cdiv(b16, n_steps), 16)

    # shrink tile if the VMEM footprint would not fit (large layer widths)
    def _footprint(tm_):
        return (2 * tm_ * f_in_p * 2          # double-buffered bf16 x stream
                + 2 * tm_ * f_out_p * 4       # double-buffered f32 out stream
                + f_in_p * f_out_p * 2        # resident bf16 weight (x1)
                + f_out_p * 4)                # resident f32 bias
    while tm > 16 and _footprint(tm) + (8 << 20) > vmem_usable:
        tm = _round_up(tm // 2, 16)
    n_steps = pl.cdiv(b16, tm)
    b_pad = tm * n_steps

    # ---- pad to TPU-native shapes --------------------------------------------
    x_p = jnp.zeros((b_pad, f_in_p), jnp.bfloat16)
    x_p = x_p.at[:B, :f_in].set(x_flat.astype(jnp.bfloat16))
    w_p = jnp.zeros((f_in_p, f_out_p), jnp.float32).at[:f_in, :n_out].set(w_tot)
    w_p = w_p.astype(jnp.bfloat16)
    b_p = jnp.zeros((1, f_out_p), jnp.float32).at[:, :n_out].set(b_tot)

    # ---- specs / budget / cost ------------------------------------------------
    grid = (n_steps,)
    in_specs = [
        pl.BlockSpec((tm, f_in_p), lambda i: (i, 0)),     # batch-tiled bf16 x
        _resident_spec((f_in_p, f_out_p)),                # resident bf16 W
        _resident_spec((1, f_out_p)),                     # resident f32 b
    ]
    out_specs = pl.BlockSpec((tm, f_out_p), lambda i: (i, 0))

    vmem_limit = int(min(max(_footprint(tm) + (8 << 20), 32 << 20), vmem_usable))

    flops = 2 * b_pad * f_in_p * f_out_p
    bytes_accessed = (b_pad * f_in_p * 2 + b_pad * f_out_p * 4
                      + f_in_p * f_out_p * 2 + f_out_p * 4)
    cost = pl.CostEstimate(flops=flops, transcendentals=0,
                           bytes_accessed=bytes_accessed)

    out_p = pl.pallas_call(
        _mlp_kernel,
        out_shape=jax.ShapeDtypeStruct((b_pad, f_out_p), jnp.float32),
        grid=grid,
        in_specs=in_specs,
        out_specs=out_specs,
        compiler_params=pltpu.CompilerParams(
            dimension_semantics=("parallel",),
            vmem_limit_bytes=vmem_limit,
        ),
        cost_estimate=cost,
    )(x_p, w_p, b_p)

    return out_p[:B, :n_out]


def init_params(key, layer_sizes):
    """Deterministic init matching torch.nn.Linear default U(-1/sqrt(fan_in), ...)."""
    params = []
    for i in range(len(layer_sizes) - 1):
        fan_in, fan_out = layer_sizes[i], layer_sizes[i + 1]
        key, kw, kb = jax.random.split(key, 3)
        bound = 1.0 / (fan_in ** 0.5)
        w = jax.random.uniform(kw, (fan_in, fan_out), jnp.float32, -bound, bound)
        b = jax.random.uniform(kb, (1, fan_out), jnp.float32, -bound, bound)
        params.append((w, b))
    return params


if __name__ == "__main__":
    # Shapes implied by the module: dataset.n_input = C*H*W (after Flatten),
    # hidden layer_list = [32], dataset.n_output = 10.
    B, C, H, W = 2, 4, 16, 16
    n_input = C * H * W          # 1024
    hidden = [32]
    n_output = 10
    layer_sizes = [n_input] + hidden + [n_output]

    key = jax.random.PRNGKey(0)
    key, kx = jax.random.split(key)
    x = jax.random.normal(kx, (B, C, H, W), jnp.float32)   # NCHW like PyTorch

    params = init_params(key, layer_sizes)

    # nn.Flatten(): [B, C, H, W] -> [B, C*H*W] (glue, outside the kernel)
    x_flat = x.reshape(B, n_input)

    out = mlp_forward(x_flat, params)
    out = jax.block_until_ready(out)

    # Sanity check against a plain-JAX f32 reference (bf16 MXU operands =>
    # slightly looser tolerance than pure f32).
    ref = x_flat
    for w, b in params:
        ref = ref @ w + b
    assert out.shape == (B, n_output)
    assert jnp.allclose(out, ref, atol=1e-2, rtol=1e-2), float(
        jnp.max(jnp.abs(out - ref)))

    print("KERNEL_OK")
</pallas_src>

<mosaic_0001>
module attributes {stable_mosaic.version = 11 : i64} {
  func.func @_mlp_kernel(%arg0: i32, %arg1: memref<16x1024xbf16, #tpu.memory_space<vmem>>, %arg2: memref<1024x128xbf16, #tpu.memory_space<vmem>>, %arg3: memref<1x128xf32, #tpu.memory_space<vmem>>, %arg4: memref<16x128xf32, #tpu.memory_space<vmem>>) attributes {dimension_semantics = [#tpu.dimension_semantics<parallel>], iteration_bounds = array<i64: 1>, scalar_prefetch = 0 : i64, scratch_operands = 0 : i64, tpu.core_type = #tpu.core_type<tc>, window_params = [{transform_indices = @transform_0, window_bounds = array<i64: 16, 1024>}, {pipeline_mode = #tpu.pipeline_mode<synchronous>, transform_indices = @transform_1, window_bounds = array<i64: 1024, 128>}, {pipeline_mode = #tpu.pipeline_mode<synchronous>, transform_indices = @transform_2, window_bounds = array<i64: 1, 128>}, {transform_indices = @transform_3, window_bounds = array<i64: 16, 128>}]} {
    %c0 = arith.constant 0 : index
    %c0_0 = arith.constant 0 : index
    %0 = vector.load %arg1[%c0, %c0_0] : memref<16x1024xbf16, #tpu.memory_space<vmem>>, vector<16x1024xbf16>
    %c0_1 = arith.constant 0 : index
    %c0_2 = arith.constant 0 : index
    %1 = vector.load %arg2[%c0_1, %c0_2] : memref<1024x128xbf16, #tpu.memory_space<vmem>>, vector<1024x128xbf16>
    %cst = arith.constant dense<0.000000e+00> : vector<16x128xf32>
    %2 = tpu.matmul %0, %1, %cst {dimension_numbers = #tpu.dot_dimension_numbers<[1], [0], [0], [1], [0, 0, 1, 1], [], []>} : vector<16x1024xbf16>, vector<1024x128xbf16>, vector<16x128xf32> -> vector<16x128xf32>
    %c0_3 = arith.constant 0 : index
    %c0_4 = arith.constant 0 : index
    %3 = vector.load %arg3[%c0_3, %c0_4] : memref<1x128xf32, #tpu.memory_space<vmem>>, vector<1x128xf32>
    %4 = vector.broadcast %3 : vector<1x128xf32> to vector<16x128xf32>
    %5 = arith.addf %2, %4 : vector<16x128xf32>
    %c0_5 = arith.constant 0 : index
    %c0_6 = arith.constant 0 : index
    %6 = vector.load %arg4[%c0_5, %c0_6] : memref<16x128xf32, #tpu.memory_space<vmem>>, vector<16x128xf32>
    tpu.vector_store %arg4[%c0_5, %c0_6], %5 {strides = array<i32>} : memref<16x128xf32, #tpu.memory_space<vmem>>, vector<16x128xf32>,
    return
  }
  func.func @transform_0(%arg0: i32) -> (i32, i32) {
    %c0_i32 = arith.constant 0 : i32
    %c0_i32_0 = arith.constant 0 : i32
    return %arg0, %c0_i32 : i32, i32
  }
  func.func @transform_1(%arg0: i32) -> (i32, i32) {
    %c0_i32 = arith.constant 0 : i32
    %c0_i32_0 = arith.constant 0 : i32
    %c0_i32_1 = arith.constant 0 : i32
    return %c0_i32, %c0_i32_0 : i32, i32
  }
  func.func @transform_2(%arg0: i32) -> (i32, i32) {
    %c0_i32 = arith.constant 0 : i32
    %c0_i32_0 = arith.constant 0 : i32
    %c0_i32_1 = arith.constant 0 : i32
    return %c0_i32, %c0_i32_0 : i32, i32
  }
  func.func @transform_3(%arg0: i32) -> (i32, i32) {
    %c0_i32 = arith.constant 0 : i32
    %c0_i32_0 = arith.constant 0 : i32
    return %arg0, %c0_i32 : i32, i32
  }
}

</mosaic_0001>

<llo_original>
// kernel: mlp_forward.1
$region0: #{mlp_forward.1}
  #allocation0 [shape = 'u32[]', space=smem, size = 0x4, offset = 0x4, fixed_abs, tag = 'smem constant byte address 0x4 - core index']
  #allocation1 [shape = 'u32[144,128]{1,0:T(1,128)}', space=vmem, size = 0x12000, scoped, tag = 'internal scratch']
  %s0 = inlined_call_operand.vmem [shape: bf16[16,1024], index: 0, kind: input, shape index: {}]
  %s1 = inlined_call_operand.vmem [shape: bf16[1024,128], index: 1, kind: input, shape index: {}]
  %s2 = inlined_call_operand.vmem [shape: f32[1,128], index: 2, kind: input, shape index: {}]
  %s3 = inlined_call_operand.vmem [shape: f32[16,128], index: 3, kind: output, shape index: {}]
  %s4 = sld [smem:[#allocation0]]
  $region22: #{mlp_forward.1} parent=0
    _
  %s6 = ssub.s32 1, %s4
  %s7 = scalar_select 0, %s6, %s4
  // Predicated region
  $region2: #{mlp_forward.1} parent=0 // pred_check
    _
  $region3: #{mlp_forward.1} parent=0 // pred_check_branch
    %9 = sbr.rel (0) target = $region5
  $region4: #{mlp_forward.1} parent=0 // pred_region
    _
  $region5: #{mlp_forward.1} parent=0 // pred_fallthru
    _
  // Predicated region
  $region6: #{mlp_forward.1} parent=0 // pred_check
    _
  $region7: #{mlp_forward.1} parent=0 // pred_check_branch
    %11 = sbr.rel (0) target = $region9
  $region8: #{mlp_forward.1} parent=0 // pred_region
    _
  $region9: #{mlp_forward.1} parent=0 // pred_fallthru
    _
  // Predicated region
  $region10: #{mlp_forward.1} parent=0 // pred_check
    _
  $region11: #{mlp_forward.1} parent=0 // pred_check_branch
    %13 = sbr.rel (0) target = $region13
  $region12: #{mlp_forward.1} parent=0 // pred_region
    _
  $region13: #{mlp_forward.1} parent=0 // pred_fallthru
    _
  %v15 = vld [vmem:[%s0] sm:$0xff]
  %v16 = vld [vmem:[%s0 + $0x8] sm:$0xff]
  %v17 = vld [vmem:[%s0 + $0x10] sm:$0xff]
  %v18 = vld [vmem:[%s0 + $0x18] sm:$0xff]
  %v19 = vld [vmem:[%s0 + $0x20] sm:$0xff]
  %v20 = vld [vmem:[%s0 + $0x28] sm:$0xff]
  %v21 = vld [vmem:[%s0 + $0x30] sm:$0xff]
  %v22 = vld [vmem:[%s0 + $0x38] sm:$0xff]
  %v23 = vld [vmem:[%s1] sm:$0xf]
  %v24 = vld [vmem:[%s1 + $0x4] sm:$0xf]
  %v25 = vld [vmem:[%s1 + $0x8] sm:$0xf]
  %v26 = vld [vmem:[%s1 + $0xc] sm:$0xf]
  %v27 = vld [vmem:[%s1 + $0x10] sm:$0xf]
  %v28 = vld [vmem:[%s1 + $0x14] sm:$0xf]
  %v29 = vld [vmem:[%s1 + $0x18] sm:$0xf]
  %v30 = vld [vmem:[%s1 + $0x1c] sm:$0xf]
  %v31 = vld [vmem:[%s1 + $0x20] sm:$0xf]
  %v32 = vld [vmem:[%s1 + $0x24] sm:$0xf]
  %v33 = vld [vmem:[%s1 + $0x28] sm:$0xf]
  %v34 = vld [vmem:[%s1 + $0x2c] sm:$0xf]
  %v35 = vld [vmem:[%s1 + $0x30] sm:$0xf]
  %v36 = vld [vmem:[%s1 + $0x34] sm:$0xf]
  %v37 = vld [vmem:[%s1 + $0x38] sm:$0xf]
  %v38 = vld [vmem:[%s1 + $0x3c] sm:$0xf]
  %v39 = vld [vmem:[%s1 + $0x40] sm:$0xf]
  %v40 = vld [vmem:[%s1 + $0x44] sm:$0xf]
  %v41 = vld [vmem:[%s1 + $0x48] sm:$0xf]
  %v42 = vld [vmem:[%s1 + $0x4c] sm:$0xf]
  %v43 = vld [vmem:[%s1 + $0x50] sm:$0xf]
  %v44 = vld [vmem:[%s1 + $0x54] sm:$0xf]
  %v45 = vld [vmem:[%s1 + $0x58] sm:$0xf]
  %v46 = vld [vmem:[%s1 + $0x5c] sm:$0xf]
  %v47 = vld [vmem:[%s1 + $0x60] sm:$0xf]
  %v48 = vld [vmem:[%s1 + $0x64] sm:$0xf]
  %v49 = vld [vmem:[%s1 + $0x68] sm:$0xf]
  %v50 = vld [vmem:[%s1 + $0x6c] sm:$0xf]
  %v51 = vld [vmem:[%s1 + $0x70] sm:$0xf]
  %v52 = vld [vmem:[%s1 + $0x74] sm:$0xf]
  %v53 = vld [vmem:[%s1 + $0x78] sm:$0xf]
  %v54 = vld [vmem:[%s1 + $0x7c] sm:$0xf]
  %v55 = vld [vmem:[%s1 + $0x80] sm:$0xf]
  %v56 = vld [vmem:[%s1 + $0x84] sm:$0xf]
  %v57 = vld [vmem:[%s1 + $0x88] sm:$0xf]
  %v58 = vld [vmem:[%s1 + $0x8c] sm:$0xf]
  %v59 = vld [vmem:[%s1 + $0x90] sm:$0xf]
  %v60 = vld [vmem:[%s1 + $0x94] sm:$0xf]
  %v61 = vld [vmem:[%s1 + $0x98] sm:$0xf]
  %v62 = vld [vmem:[%s1 + $0x9c] sm:$0xf]
  %v63 = vld [vmem:[%s1 + $0xa0] sm:$0xf]
  %v64 = vld [vmem:[%s1 + $0xa4] sm:$0xf]
  %v65 = vld [vmem:[%s1 + $0xa8] sm:$0xf]
  %v66 = vld [vmem:[%s1 + $0xac] sm:$0xf]
  %v67 = vld [vmem:[%s1 + $0xb0] sm:$0xf]
  %v68 = vld [vmem:[%s1 + $0xb4] sm:$0xf]
  %v69 = vld [vmem:[%s1 + $0xb8] sm:$0xf]
  %v70 = vld [vmem:[%s1 + $0xbc] sm:$0xf]
  %v71 = vld [vmem:[%s1 + $0xc0] sm:$0xf]
  %v72 = vld [vmem:[%s1 + $0xc4] sm:$0xf]
  %v73 = vld [vmem:[%s1 + $0xc8] sm:$0xf]
  %v74 = vld [vmem:[%s1 + $0xcc] sm:$0xf]
  %v75 = vld [vmem:[%s1 + $0xd0] sm:$0xf]
  %v76 = vld [vmem:[%s1 + $0xd4] sm:$0xf]
  %v77 = vld [vmem:[%s1 + $0xd8] sm:$0xf]
  %v78 = vld [vmem:[%s1 + $0xdc] sm:$0xf]
  %v79 = vld [vmem:[%s1 + $0xe0] sm:$0xf]
  %v80 = vld [vmem:[%s1 + $0xe4] sm:$0xf]
  %v81 = vld [vmem:[%s1 + $0xe8] sm:$0xf]
  %v82 = vld [vmem:[%s1 + $0xec] sm:$0xf]
  %v83 = vld [vmem:[%s1 + $0xf0] sm:$0xf]
  %v84 = vld [vmem:[%s1 + $0xf4] sm:$0xf]
  %v85 = vld [vmem:[%s1 + $0xf8] sm:$0xf]
  %v86 = vld [vmem:[%s1 + $0xfc] sm:$0xf]
  %v87 = vld [vmem:[%s1 + $0x100] sm:$0xf]
  %v88 = vld [vmem:[%s1 + $0x104] sm:$0xf]
  %v89 = vld [vmem:[%s1 + $0x108] sm:$0xf]
  %v90 = vld [vmem:[%s1 + $0x10c] sm:$0xf]
  %v91 = vld [vmem:[%s1 + $0x110] sm:$0xf]
  %v92 = vld [vmem:[%s1 + $0x114] sm:$0xf]
  %v93 = vld [vmem:[%s1 + $0x118] sm:$0xf]
  %v94 = vld [vmem:[%s1 + $0x11c] sm:$0xf]
  %v95 = vld [vmem:[%s1 + $0x120] sm:$0xf]
  %v96 = vld [vmem:[%s1 + $0x124] sm:$0xf]
  %v97 = vld [vmem:[%s1 + $0x128] sm:$0xf]
  %v98 = vld [vmem:[%s1 + $0x12c] sm:$0xf]
  %v99 = vld [vmem:[%s1 + $0x130] sm:$0xf]
  %v100 = vld [vmem:[%s1 + $0x134] sm:$0xf]
  %v101 = vld [vmem:[%s1 + $0x138] sm:$0xf]
  %v102 = vld [vmem:[%s1 + $0x13c] sm:$0xf]
  %v103 = vld [vmem:[%s1 + $0x140] sm:$0xf]
  %v104 = vld [vmem:[%s1 + $0x144] sm:$0xf]
  %v105 = vld [vmem:[%s1 + $0x148] sm:$0xf]
  %v106 = vld [vmem:[%s1 + $0x14c] sm:$0xf]
  %v107 = vld [vmem:[%s1 + $0x150] sm:$0xf]
  %v108 = vld [vmem:[%s1 + $0x154] sm:$0xf]
  %v109 = vld [vmem:[%s1 + $0x158] sm:$0xf]
  %v110 = vld [vmem:[%s1 + $0x15c] sm:$0xf]
  %v111 = vld [vmem:[%s1 + $0x160] sm:$0xf]
  %v112 = vld [vmem:[%s1 + $0x164] sm:$0xf]
  %v113 = vld [vmem:[%s1 + $0x168] sm:$0xf]
  %v114 = vld [vmem:[%s1 + $0x16c] sm:$0xf]
  %v115 = vld [vmem:[%s1 + $0x170] sm:$0xf]
  %v116 = vld [vmem:[%s1 + $0x174] sm:$0xf]
  %v117 = vld [vmem:[%s1 + $0x178] sm:$0xf]
  %v118 = vld [vmem:[%s1 + $0x17c] sm:$0xf]
  %v119 = vld [vmem:[%s1 + $0x180] sm:$0xf]
  %v120 = vld [vmem:[%s1 + $0x184] sm:$0xf]
  %v121 = vld [vmem:[%s1 + $0x188] sm:$0xf]
  %v122 = vld [vmem:[%s1 + $0x18c] sm:$0xf]
  %v123 = vld [vmem:[%s1 + $0x190] sm:$0xf]
  %v124 = vld [vmem:[%s1 + $0x194] sm:$0xf]
  %v125 = vld [vmem:[%s1 + $0x198] sm:$0xf]
  %v126 = vld [vmem:[%s1 + $0x19c] sm:$0xf]
  %v127 = vld [vmem:[%s1 + $0x1a0] sm:$0xf]
  %v128 = vld [vmem:[%s1 + $0x1a4] sm:$0xf]
  %v129 = vld [vmem:[%s1 + $0x1a8] sm:$0xf]
  %v130 = vld [vmem:[%s1 + $0x1ac] sm:$0xf]
  %v131 = vld [vmem:[%s1 + $0x1b0] sm:$0xf]
  %v132 = vld [vmem:[%s1 + $0x1b4] sm:$0xf]
  %v133 = vld [vmem:[%s1 + $0x1b8] sm:$0xf]
  %v134 = vld [vmem:[%s1 + $0x1bc] sm:$0xf]
  %v135 = vld [vmem:[%s1 + $0x1c0] sm:$0xf]
  %v136 = vld [vmem:[%s1 + $0x1c4] sm:$0xf]
  %v137 = vld [vmem:[%s1 + $0x1c8] sm:$0xf]
  %v138 = vld [vmem:[%s1 + $0x1cc] sm:$0xf]
  %v139 = vld [vmem:[%s1 + $0x1d0] sm:$0xf]
  %v140 = vld [vmem:[%s1 + $0x1d4] sm:$0xf]
  %v141 = vld [vmem:[%s1 + $0x1d8] sm:$0xf]
  %v142 = vld [vmem:[%s1 + $0x1dc] sm:$0xf]
  %v143 = vld [vmem:[%s1 + $0x1e0] sm:$0xf]
  %v144 = vld [vmem:[%s1 + $0x1e4] sm:$0xf]
  %v145 = vld [vmem:[%s1 + $0x1e8] sm:$0xf]
  %v146 = vld [vmem:[%s1 + $0x1ec] sm:$0xf]
  %v147 = vld [vmem:[%s1 + $0x1f0] sm:$0xf]
  %v148 = vld [vmem:[%s1 + $0x1f4] sm:$0xf]
  %v149 = vld [vmem:[%s1 + $0x1f8] sm:$0xf]
  %v150 = vld [vmem:[%s1 + $0x1fc] sm:$0xf]
  %v151 = vld [vmem:[%s2] sm:$0x1]
  %v153 = vlaneseq
  %v154 = vshrl.u32 %v153, 7
  %v155 = vsub.s32 0, %v154
  %v156 = vrot.slane %v151, %v155
  %v166 = vunpack.c.l.b16 %v15
  %v167 = vunpack.c.h.b16 %v15
  %v168 = vunpack.c.l.b16 %v16
  %v169 = vunpack.c.h.b16 %v16
  %v170 = vunpack.c.l.b16 %v17
  %v171 = vunpack.c.h.b16 %v17
  %v172 = vunpack.c.l.b16 %v18
  %v173 = vunpack.c.h.b16 %v18
  %v174 = vunpack.c.l.b16 %v19
  %v175 = vunpack.c.h.b16 %v19
  %v176 = vunpack.c.l.b16 %v20
  %v177 = vunpack.c.h.b16 %v20
  %v178 = vunpack.c.l.b16 %v21
  %v179 = vunpack.c.h.b16 %v21
  %v180 = vunpack.c.l.b16 %v22
  %v181 = vunpack.c.h.b16 %v22
  %v182 = vpack.c.b16 %v174, %v166
  %v183 = vpack.c.b16 %v175, %v167
  %v184 = vpack.c.b16 %v176, %v168
  %v185 = vpack.c.b16 %v177, %v169
  %v186 = vpack.c.b16 %v178, %v170
  %v187 = vpack.c.b16 %v179, %v171
  %v188 = vpack.c.b16 %v180, %v172
  %v189 = vpack.c.b16 %v181, %v173
  %v326 = vunpack.c.l.b16 %v23
  %v327 = vunpack.c.l.b16 %v24
  %v328 = vunpack.c.l.b16 %v25
  %v329 = vunpack.c.l.b16 %v26
  %v330 = vunpack.c.l.b16 %v27
  %v331 = vunpack.c.l.b16 %v28
  %v332 = vunpack.c.l.b16 %v29
  %v333 = vunpack.c.l.b16 %v30
  %v334 = vunpack.c.l.b16 %v31
  %v335 = vunpack.c.l.b16 %v32
  %v336 = vunpack.c.l.b16 %v33
  %v337 = vunpack.c.l.b16 %v34
  %v338 = vunpack.c.l.b16 %v35
  %v339 = vunpack.c.l.b16 %v36
  %v340 = vunpack.c.l.b16 %v37
  %v341 = vunpack.c.l.b16 %v38
  %v342 = vunpack.c.l.b16 %v39
  %v343 = vunpack.c.l.b16 %v40
  %v344 = vunpack.c.l.b16 %v41
  %v345 = vunpack.c.l.b16 %v42
  %v346 = vunpack.c.l.b16 %v43
  %v347 = vunpack.c.l.b16 %v44
  %v348 = vunpack.c.l.b16 %v45
  %v349 = vunpack.c.l.b16 %v46
  %v350 = vunpack.c.l.b16 %v47
  %v351 = vunpack.c.l.b16 %v48
  %v352 = vunpack.c.l.b16 %v49
  %v353 = vunpack.c.l.b16 %v50
  %v354 = vunpack.c.l.b16 %v51
  %v355 = vunpack.c.l.b16 %v52
  %v356 = vunpack.c.l.b16 %v53
  %v357 = vunpack.c.l.b16 %v54
  %v358 = vunpack.c.l.b16 %v55
  %v359 = vunpack.c.l.b16 %v56
  %v360 = vunpack.c.l.b16 %v57
  %v361 = vunpack.c.l.b16 %v58
  %v362 = vunpack.c.l.b16 %v59
  %v363 = vunpack.c.l.b16 %v60
  %v364 = vunpack.c.l.b16 %v61
  %v365 = vunpack.c.l.b16 %v62
  %v366 = vunpack.c.l.b16 %v63
  %v367 = vunpack.c.l.b16 %v64
  %v368 = vunpack.c.l.b16 %v65
  %v369 = vunpack.c.l.b16 %v66
  %v370 = vunpack.c.l.b16 %v67
  %v371 = vunpack.c.l.b16 %v68
  %v372 = vunpack.c.l.b16 %v69
  %v373 = vunpack.c.l.b16 %v70
  %v374 = vunpack.c.l.b16 %v71
  %v375 = vunpack.c.l.b16 %v72
  %v376 = vunpack.c.l.b16 %v73
  %v377 = vunpack.c.l.b16 %v74
  %v378 = vunpack.c.l.b16 %v75
  %v379 = vunpack.c.l.b16 %v76
  %v380 = vunpack.c.l.b16 %v77
  %v381 = vunpack.c.l.b16 %v78
  %v382 = vunpack.c.l.b16 %v79
  %v383 = vunpack.c.l.b16 %v80
  %v384 = vunpack.c.l.b16 %v81
  %v385 = vunpack.c.l.b16 %v82
  %v386 = vunpack.c.l.b16 %v83
  %v387 = vunpack.c.l.b16 %v84
  %v388 = vunpack.c.l.b16 %v85
  %v389 = vunpack.c.l.b16 %v86
  %v390 = vunpack.c.l.b16 %v87
  %v391 = vunpack.c.l.b16 %v88
  %v392 = vunpack.c.l.b16 %v89
  %v393 = vunpack.c.l.b16 %v90
  %v394 = vunpack.c.l.b16 %v91
  %v395 = vunpack.c.l.b16 %v92
  %v396 = vunpack.c.l.b16 %v93
  %v397 = vunpack.c.l.b16 %v94
  %v398 = vunpack.c.l.b16 %v95
  %v399 = vunpack.c.l.b16 %v96
  %v400 = vunpack.c.l.b16 %v97
  %v401 = vunpack.c.l.b16 %v98
  %v402 = vunpack.c.l.b16 %v99
  %v403 = vunpack.c.l.b16 %v100
  %v404 = vunpack.c.l.b16 %v101
  %v405 = vunpack.c.l.b16 %v102
  %v406 = vunpack.c.l.b16 %v103
  %v407 = vunpack.c.l.b16 %v104
  %v408 = vunpack.c.l.b16 %v105
  %v409 = vunpack.c.l.b16 %v106
  %v410 = vunpack.c.l.b16 %v107
  %v411 = vunpack.c.l.b16 %v108
  %v412 = vunpack.c.l.b16 %v109
  %v413 = vunpack.c.l.b16 %v110
  %v414 = vunpack.c.l.b16 %v111
  %v415 = vunpack.c.l.b16 %v112
  %v416 = vunpack.c.l.b16 %v113
  %v417 = vunpack.c.l.b16 %v114
  %v418 = vunpack.c.l.b16 %v115
  %v419 = vunpack.c.l.b16 %v116
  %v420 = vunpack.c.l.b16 %v117
  %v421 = vunpack.c.l.b16 %v118
  %v422 = vunpack.c.l.b16 %v119
  %v423 = vunpack.c.l.b16 %v120
  %v424 = vunpack.c.l.b16 %v121
  %v425 = vunpack.c.l.b16 %v122
  %v426 = vunpack.c.l.b16 %v123
  %v427 = vunpack.c.l.b16 %v124
  %v428 = vunpack.c.l.b16 %v125
  %v429 = vunpack.c.l.b16 %v126
  %v430 = vunpack.c.l.b16 %v127
  %v431 = vunpack.c.l.b16 %v128
  %v432 = vunpack.c.l.b16 %v129
  %v433 = vunpack.c.l.b16 %v130
  %v434 = vunpack.c.l.b16 %v131
  %v435 = vunpack.c.l.b16 %v132
  %v436 = vunpack.c.l.b16 %v133
  %v437 = vunpack.c.l.b16 %v134
  %v438 = vunpack.c.l.b16 %v135
  %v439 = vunpack.c.l.b16 %v136
  %v440 = vunpack.c.l.b16 %v137
  %v441 = vunpack.c.l.b16 %v138
  %v442 = vunpack.c.l.b16 %v139
  %v443 = vunpack.c.l.b16 %v140
  %v444 = vunpack.c.l.b16 %v141
  %v445 = vunpack.c.l.b16 %v142
  %v446 = vunpack.c.l.b16 %v143
  %v447 = vunpack.c.l.b16 %v144
  %v448 = vunpack.c.l.b16 %v145
  %v449 = vunpack.c.l.b16 %v146
  %v450 = vunpack.c.l.b16 %v147
  %v451 = vunpack.c.l.b16 %v148
  %v452 = vunpack.c.l.b16 %v149
  %v453 = vunpack.c.l.b16 %v150
  %v454 = vpack.c.b16 %v327, %v326
  %v455 = vpack.c.b16 %v329, %v328
  %v456 = vpack.c.b16 %v331, %v330
  %v457 = vpack.c.b16 %v333, %v332
  %v458 = vpack.c.b16 %v335, %v334
  %v459 = vpack.c.b16 %v337, %v336
  %v460 = vpack.c.b16 %v339, %v338
  %v461 = vpack.c.b16 %v341, %v340
  %v462 = vpack.c.b16 %v343, %v342
  %v463 = vpack.c.b16 %v345, %v344
  %v464 = vpack.c.b16 %v347, %v346
  %v465 = vpack.c.b16 %v349, %v348
  %v466 = vpack.c.b16 %v351, %v350
  %v467 = vpack.c.b16 %v353, %v352
  %v468 = vpack.c.b16 %v355, %v354
  %v469 = vpack.c.b16 %v357, %v356
  %v470 = vpack.c.b16 %v359, %v358
  %v471 = vpack.c.b16 %v361, %v360
  %v472 = vpack.c.b16 %v363, %v362
  %v473 = vpack.c.b16 %v365, %v364
  %v474 = vpack.c.b16 %v367, %v366
  %v475 = vpack.c.b16 %v369, %v368
  %v476 = vpack.c.b16 %v371, %v370
  %v477 = vpack.c.b16 %v373, %v372
  %v478 = vpack.c.b16 %v375, %v374
  %v479 = vpack.c.b16 %v377, %v376
  %v480 = vpack.c.b16 %v379, %v378
  %v481 = vpack.c.b16 %v381, %v380
  %v482 = vpack.c.b16 %v383, %v382
  %v483 = vpack.c.b16 %v385, %v384
  %v484 = vpack.c.b16 %v387, %v386
  %v485 = vpack.c.b16 %v389, %v388
  %v486 = vpack.c.b16 %v391, %v390
  %v487 = vpack.c.b16 %v393, %v392
  %v488 = vpack.c.b16 %v395, %v394
  %v489 = vpack.c.b16 %v397, %v396
  %v490 = vpack.c.b16 %v399, %v398
  %v491 = vpack.c.b16 %v401, %v400
  %v492 = vpack.c.b16 %v403, %v402
  %v493 = vpack.c.b16 %v405, %v404
  %v494 = vpack.c.b16 %v407, %v406
  %v495 = vpack.c.b16 %v409, %v408
  %v496 = vpack.c.b16 %v411, %v410
  %v497 = vpack.c.b16 %v413, %v412
  %v498 = vpack.c.b16 %v415, %v414
  %v499 = vpack.c.b16 %v417, %v416
  %v500 = vpack.c.b16 %v419, %v418
  %v501 = vpack.c.b16 %v421, %v420
  %v502 = vpack.c.b16 %v423, %v422
  %v503 = vpack.c.b16 %v425, %v424
  %v504 = vpack.c.b16 %v427, %v426
  %v505 = vpack.c.b16 %v429, %v428
  %v506 = vpack.c.b16 %v431, %v430
  %v507 = vpack.c.b16 %v433, %v432
  %v508 = vpack.c.b16 %v435, %v434
  %v509 = vpack.c.b16 %v437, %v436
  %v510 = vpack.c.b16 %v439, %v438
  %v511 = vpack.c.b16 %v441, %v440
  %v512 = vpack.c.b16 %v443, %v442
  %v513 = vpack.c.b16 %v445, %v444
  %v514 = vpack.c.b16 %v447, %v446
  %v515 = vpack.c.b16 %v449, %v448
  %v516 = vpack.c.b16 %v451, %v450
  %v517 = vpack.c.b16 %v453, %v452
  %582 = vmatprep.subr.bf16.mxu0 0
  %583 = vmatpush1.bf16.msra.mxu0 %v454
  %584 = vmatprep.subr.bf16.mxu0 0
  %585 = vmatpush1.bf16.msra.mxu0 %v455
  %586 = vmatprep.subr.bf16.mxu0 0
  %587 = vmatpush1.bf16.msra.mxu0 %v456
  %588 = vmatprep.subr.bf16.mxu0 0
  %589 = vmatpush1.bf16.msra.mxu0 %v457
  %590 = vmatprep.subr.bf16.mxu0 0
  %591 = vmatpush1.bf16.msra.mxu0 %v458
  %592 = vmatprep.subr.bf16.mxu0 0
  %593 = vmatpush1.bf16.msra.mxu0 %v459
  %594 = vmatprep.subr.bf16.mxu0 0
  %595 = vmatpush1.bf16.msra.mxu0 %v460
  %596 = vmatprep.subr.bf16.mxu0 0
  %597 = vmatpush1.bf16.msra.mxu0 %v461
  %598 = vmatprep.subr.bf16.mxu0 0
  %599 = vmatpush1.bf16.msra.mxu0 %v462
  %600 = vmatprep.subr.bf16.mxu0 0
  %601 = vmatpush1.bf16.msra.mxu0 %v463
  %602 = vmatprep.subr.bf16.mxu0 0
  %603 = vmatpush1.bf16.msra.mxu0 %v464
  %604 = vmatprep.subr.bf16.mxu0 0
  %605 = vmatpush1.bf16.msra.mxu0 %v465
  %606 = vmatprep.subr.bf16.mxu0 0
  %607 = vmatpush1.bf16.msra.mxu0 %v466
  %608 = vmatprep.subr.bf16.mxu0 0
  %609 = vmatpush1.bf16.msra.mxu0 %v467
  %610 = vmatprep.subr.bf16.mxu0 0
  %611 = vmatpush1.bf16.msra.mxu0 %v468
  %612 = vmatprep.subr.bf16.mxu0 0
  %613 = vmatpush1.bf16.msra.mxu0 %v469
  %614 = vmatprep.mubr.bf16.mxu0 %v183
  %615 = vmatmul.mubr.bf16.gmra.mrb[0].mxu0 %v182
  %v616 = vpop.f32.mrb[0].mxu0
  %v617 = vadd.f32 %v156, %v616
  %v618 = vpop.f32.mrb[0].mxu0
  %v619 = vpop.f32.mrb[0].mxu0
  %v620 = vadd.f32 %v156, %v619
  %v621 = vpop.f32.mrb[0].mxu0
  %622 = vdwg.mxu0
  %623 = vmatprep.subr.bf16.mxu0 0
  %624 = vmatpush1.bf16.msra.mxu0 %v470
  %625 = vmatprep.subr.bf16.mxu0 0
  %626 = vmatpush1.bf16.msra.mxu0 %v471
  %627 = vmatprep.subr.bf16.mxu0 0
  %628 = vmatpush1.bf16.msra.mxu0 %v472
  %629 = vmatprep.subr.bf16.mxu0 0
  %630 = vmatpush1.bf16.msra.mxu0 %v473
  %631 = vmatprep.subr.bf16.mxu0 0
  %632 = vmatpush1.bf16.msra.mxu0 %v474
  %633 = vmatprep.subr.bf16.mxu0 0
  %634 = vmatpush1.bf16.msra.mxu0 %v475
  %635 = vmatprep.subr.bf16.mxu0 0
  %636 = vmatpush1.bf16.msra.mxu0 %v476
  %637 = vmatprep.subr.bf16.mxu0 0
  %638 = vmatpush1.bf16.msra.mxu0 %v477
  %639 = vmatprep.subr.bf16.mxu0 0
  %640 = vmatpush1.bf16.msra.mxu0 %v478
  %641 = vmatprep.subr.bf16.mxu0 0
  %642 = vmatpush1.bf16.msra.mxu0 %v479
  %643 = vmatprep.subr.bf16.mxu0 0
  %644 = vmatpush1.bf16.msra.mxu0 %v480
  %645 = vmatprep.subr.bf16.mxu0 0
  %646 = vmatpush1.bf16.msra.mxu0 %v481
  %647 = vmatprep.subr.bf16.mxu0 0
  %648 = vmatpush1.bf16.msra.mxu0 %v482
  %649 = vmatprep.subr.bf16.mxu0 0
  %650 = vmatpush1.bf16.msra.mxu0 %v483
  %651 = vmatprep.subr.bf16.mxu0 0
  %652 = vmatpush1.bf16.msra.mxu0 %v484
  %653 = vmatprep.subr.bf16.mxu0 0
  %654 = vmatpush1.bf16.msra.mxu0 %v485
  %655 = vmatprep.mubr.bf16.mxu0 %v185
  %656 = vmatmul.mubr.bf16.gmra.mrb[0].mxu0 %v184
  %v657 = vpop.f32.mrb[0].mxu0
  %v658 = vadd.f32 %v617, %v657
  %v659 = vpop.f32.mrb[0].mxu0
  %v660 = vpop.f32.mrb[0].mxu0
  %v661 = vadd.f32 %v620, %v660
  %v662 = vpop.f32.mrb[0].mxu0
  %663 = vdwg.mxu0
  %664 = vmatprep.subr.bf16.mxu0 0
  %665 = vmatpush1.bf16.msra.mxu0 %v486
  %666 = vmatprep.subr.bf16.mxu0 0
  %667 = vmatpush1.bf16.msra.mxu0 %v487
  %668 = vmatprep.subr.bf16.mxu0 0
  %669 = vmatpush1.bf16.msra.mxu0 %v488
  %670 = vmatprep.subr.bf16.mxu0 0
  %671 = vmatpush1.bf16.msra.mxu0 %v489
  %672 = vmatprep.subr.bf16.mxu0 0
  %673 = vmatpush1.bf16.msra.mxu0 %v490
  %674 = vmatprep.subr.bf16.mxu0 0
  %675 = vmatpush1.bf16.msra.mxu0 %v491
  %676 = vmatprep.subr.bf16.mxu0 0
  %677 = vmatpush1.bf16.msra.mxu0 %v492
  %678 = vmatprep.subr.bf16.mxu0 0
  %679 = vmatpush1.bf16.msra.mxu0 %v493
  %680 = vmatprep.subr.bf16.mxu0 0
  %681 = vmatpush1.bf16.msra.mxu0 %v494
  %682 = vmatprep.subr.bf16.mxu0 0
  %683 = vmatpush1.bf16.msra.mxu0 %v495
  %684 = vmatprep.subr.bf16.mxu0 0
  %685 = vmatpush1.bf16.msra.mxu0 %v496
  %686 = vmatprep.subr.bf16.mxu0 0
  %687 = vmatpush1.bf16.msra.mxu0 %v497
  %688 = vmatprep.subr.bf16.mxu0 0
  %689 = vmatpush1.bf16.msra.mxu0 %v498
  %690 = vmatprep.subr.bf16.mxu0 0
  %691 = vmatpush1.bf16.msra.mxu0 %v499
  %692 = vmatprep.subr.bf16.mxu0 0
  %693 = vmatpush1.bf16.msra.mxu0 %v500
  %694 = vmatprep.subr.bf16.mxu0 0
  %695 = vmatpush1.bf16.msra.mxu0 %v501
  %696 = vmatprep.mubr.bf16.mxu0 %v187
  %697 = vmatmul.mubr.bf16.gmra.mrb[0].mxu0 %v186
  %v698 = vpop.f32.mrb[0].mxu0
  %v699 = vadd.f32 %v658, %v698
  %v700 = vpop.f32.mrb[0].mxu0
  %v701 = vpop.f32.mrb[0].mxu0
  %v702 = vadd.f32 %v661, %v701
  %v703 = vpop.f32.mrb[0].mxu0
  %704 = vdwg.mxu0
  %705 = vmatprep.subr.bf16.mxu0 0
  %706 = vmatpush1.bf16.msra.mxu0 %v502
  %707 = vmatprep.subr.bf16.mxu0 0
  %708 = vmatpush1.bf16.msra.mxu0 %v503
  %709 = vmatprep.subr.bf16.mxu0 0
  %710 = vmatpush1.bf16.msra.mxu0 %v504
  %711 = vmatprep.subr.bf16.mxu0 0
  %712 = vmatpush1.bf16.msra.mxu0 %v505
  %713 = vmatprep.subr.bf16.mxu0 0
  %714 = vmatpush1.bf16.msra.mxu0 %v506
  %715 = vmatprep.subr.bf16.mxu0 0
  %716 = vmatpush1.bf16.msra.mxu0 %v507
  %717 = vmatprep.subr.bf16.mxu0 0
  %718 = vmatpush1.bf16.msra.mxu0 %v508
  %719 = vmatprep.subr.bf16.mxu0 0
  %720 = vmatpush1.bf16.msra.mxu0 %v509
  %721 = vmatprep.subr.bf16.mxu0 0
  %722 = vmatpush1.bf16.msra.mxu0 %v510
  %723 = vmatprep.subr.bf16.mxu0 0
  %724 = vmatpush1.bf16.msra.mxu0 %v511
  %725 = vmatprep.subr.bf16.mxu0 0
  %726 = vmatpush1.bf16.msra.mxu0 %v512
  %727 = vmatprep.subr.bf16.mxu0 0
  %728 = vmatpush1.bf16.msra.mxu0 %v513
  %729 = vmatprep.subr.bf16.mxu0 0
  %730 = vmatpush1.bf16.msra.mxu0 %v514
  %731 = vmatprep.subr.bf16.mxu0 0
  %732 = vmatpush1.bf16.msra.mxu0 %v515
  %733 = vmatprep.subr.bf16.mxu0 0
  %734 = vmatpush1.bf16.msra.mxu0 %v516
  %735 = vmatprep.subr.bf16.mxu0 0
  %736 = vmatpush1.bf16.msra.mxu0 %v517
  %737 = vmatprep.mubr.bf16.mxu0 %v189
  %738 = vmatmul.mubr.bf16.gmra.mrb[0].mxu0 %v188
  %v739 = vpop.f32.mrb[0].mxu0
  %v740 = vadd.f32 %v699, %v739
  %v741 = vpop.f32.mrb[0].mxu0
  %v742 = vpop.f32.mrb[0].mxu0
  %v743 = vadd.f32 %v702, %v742
  %v744 = vpop.f32.mrb[0].mxu0
  %745 = vdwg.mxu0
  %746 = vst [vmem:[%s3] sm:$0xff] %v740
  %747 = vst [vmem:[%s3 + $0x8] sm:$0xff] %v743
  // Predicated region
  $region14: #{mlp_forward.1} parent=0 // pred_check
    _
  $region15: #{mlp_forward.1} parent=0 // pred_check_branch
    %749 = sbr.rel (0) target = $region17
  $region16: #{mlp_forward.1} parent=0 // pred_region
    _
  $region17: #{mlp_forward.1} parent=0 // pred_fallthru
    _
  // Predicated region
  $region18: #{mlp_forward.1} parent=0 // pred_check
    _
  $region19: #{mlp_forward.1} parent=0 // pred_check_branch
    %751 = sbr.rel (0) target = $region21
  $region20: #{mlp_forward.1} parent=0 // pred_region
    _
  $region21: #{mlp_forward.1} parent=0 // pred_fallthru
    _

</llo_original>
